<compile_context>
chip_gen: v6e
topology: v6e:2x2x1
jax: 0.10.0
libtpu: 0.0.40
codegen_flags: <defaults>
</compile_context>

<pallas_src>
import functools

import jax
import jax.numpy as jnp
from jax import lax
from jax.experimental import pallas as pl
from jax.experimental.pallas import tpu as pltpu

_LANE = 128
_SUBLANE = 8
_CHUNK_ROWS = 512          # ~256 KiB of f32 per sub-chunk -> bounded intermediates


def _dice_loss_ref(pred, true):
    """Pure-JAX reference / small-input fast path (matches the PyTorch module)."""
    b = pred.shape[0]
    p = pred.reshape(b, -1).astype(jnp.float32)
    t = true.reshape(b, -1).astype(jnp.float32)
    coff = 2.0 * (p * t).sum(1) / (p.sum(1) + t.sum(1))
    return 1.0 - coff.mean(0)


def _dice_partials_kernel(p_ref, t_ref, inter_ref, denom_ref, *,
                          rows_total, tile_rows, chunk_rows):
    """Accumulate lane-distributed partial sums of p*t (inter) and p+t (denom).

    p_ref / t_ref : (1, tile_rows, 128) VMEM input tile (batch i, row-block k)
    inter_ref     : (1, 8, 128) f32 output accumulator, resident across k
    denom_ref     : (1, 8, 128) f32 output accumulator, resident across k
    """
    k = pl.program_id(1)

    @pl.when(k == 0)
    def _():
        inter_ref[...] = jnp.zeros_like(inter_ref)
        denom_ref[...] = jnp.zeros_like(denom_ref)

    groups = chunk_rows // _SUBLANE

    def accum_chunk(chunk_idx, valid_rows):
        # valid_rows is a static Python int; it is < chunk_rows only on the
        # very last chunk of a partial final row-block.
        start = chunk_idx * chunk_rows
        if not isinstance(start, int):
            start = pl.multiple_of(start, chunk_rows)
        p = p_ref[0, pl.ds(start, chunk_rows), :].astype(jnp.float32)
        t = t_ref[0, pl.ds(start, chunk_rows), :].astype(jnp.float32)
        pt = p * t
        ps = p + t
        if valid_rows != chunk_rows:
            # Mask undefined tail rows (zeros are sum-safe; selects also stop
            # any NaN/Inf garbage from propagating).
            row = lax.broadcasted_iota(jnp.int32, (chunk_rows, _LANE), 0)
            keep = row < valid_rows
            pt = jnp.where(keep, pt, 0.0)
            ps = jnp.where(keep, ps, 0.0)
        # Fold the chunk into (8,128) vector partials with pure VPU adds
        # (sublane-group reshape is layout-preserving); the cross-lane
        # reduction is deferred to the tiny JAX epilogue.
        if groups == 1:
            inter_ref[0] += pt
            denom_ref[0] += ps
        else:
            inter_ref[0] += jnp.sum(pt.reshape(groups, _SUBLANE, _LANE), axis=0)
            denom_ref[0] += jnp.sum(ps.reshape(groups, _SUBLANE, _LANE), axis=0)

    def accum_chunks(n_chunks):
        if n_chunks == 1:
            accum_chunk(0, chunk_rows)
        elif n_chunks > 1:
            def body(j, carry):
                accum_chunk(j, chunk_rows)
                return carry
            lax.fori_loop(0, n_chunks, body, None, unroll=True)

    full_chunks_per_block = tile_rows // chunk_rows

    if rows_total % tile_rows == 0:
        # Every row-block is full: no masking anywhere.
        accum_chunks(full_chunks_per_block)
    else:
        # Only the final row-block is partial; all other blocks take the
        # unmasked path, so the iota/select cost is paid exactly once.
        rows_last = rows_total - (pl.cdiv(rows_total, tile_rows) - 1) * tile_rows
        is_last = k == pl.num_programs(1) - 1

        @pl.when(jnp.logical_not(is_last))
        def _():
            accum_chunks(full_chunks_per_block)

        @pl.when(is_last)
        def _():
            n_full = rows_last // chunk_rows
            rem = rows_last - n_full * chunk_rows
            accum_chunks(n_full)
            if rem > 0:
                accum_chunk(n_full, rem)


def dice_loss(pred, true, *, max_block_bytes=4 << 20, min_kernel_elems=1 << 15):
    """Pallas equivalent of Dice_loss.forward(pred, true).  Returns a scalar."""
    assert pred.shape == true.shape
    b = pred.shape[0]
    n = 1
    for d in pred.shape[1:]:
        n *= d

    # Small-input fast path: for tiny tensors the kernel is pure launch/grid
    # overhead; plain XLA fusion is faster and numerically identical.  Also
    # mandatory when there is not even one full 128-lane row per batch.
    if n < _LANE or b * n < min_kernel_elems:
        return _dice_loss_ref(pred, true)

    p2 = pred.reshape(b, n)
    t2 = true.reshape(b, n)

    rows = n // _LANE           # full 128-wide rows handled by the kernel
    tail = n - rows * _LANE     # <128 trailing elements/batch -> JAX epilogue

    # Lane-aligned main slab.  For n % 128 == 0 this reshape is a free view of
    # the original buffer; otherwise XLA materializes the sliced slab once
    # (no jnp.pad of both full arrays, no per-element lane masking in-kernel).
    # TODO(synk): a manual-DMA (memory_space=pl.ANY) path could stream the
    # unaligned case with zero extra HBM traffic.
    if tail == 0:
        p_main = p2.reshape(b, rows, _LANE)
        t_main = t2.reshape(b, rows, _LANE)
    else:
        p_main = p2[:, : rows * _LANE].reshape(b, rows, _LANE)
        t_main = t2[:, : rows * _LANE].reshape(b, rows, _LANE)

    # v7x megacore: if the batch axis alone cannot occupy both TensorCores,
    # split the row axis into 2 virtual batches when that is a free reshape;
    # partials are recombined per real batch in the epilogue.  No-op for b>=2.
    n_split = 2 if (b == 1 and rows % 2 == 0 and rows >= 2 * _SUBLANE) else 1
    bk = b * n_split
    rows_k = rows // n_split
    if n_split > 1:
        p_main = p_main.reshape(bk, rows_k, _LANE)
        t_main = t_main.reshape(bk, rows_k, _LANE)

    itemsize = jnp.dtype(pred.dtype).itemsize
    sub_mult = {4: _SUBLANE, 2: 16, 1: 32}.get(itemsize, _SUBLANE)

    # Row-block sizing: ~max_block_bytes per input block (default 4 MiB ->
    # 2 inputs x 2 pipeline buffers = 16 MiB of input VMEM) keeps the per-step
    # fixed overhead (~0.35 us) well under 10% of the DMA time per step.
    rows_up = -(-rows_k // sub_mult) * sub_mult
    cap_rows = max(sub_mult,
                   (max_block_bytes // (_LANE * itemsize)) // sub_mult * sub_mult)
    tile_rows = min(cap_rows, rows_up)
    chunk_rows = min(_CHUNK_ROWS, tile_rows)
    tile_rows -= tile_rows % chunk_rows      # keep chunk_rows | tile_rows
    grid_k = pl.cdiv(rows_k, tile_rows)

    kernel = functools.partial(_dice_partials_kernel, rows_total=rows_k,
                               tile_rows=tile_rows, chunk_rows=chunk_rows)

    inter, denom = pl.pallas_call(
        kernel,
        out_shape=(jax.ShapeDtypeStruct((bk, _SUBLANE, _LANE), jnp.float32),
                   jax.ShapeDtypeStruct((bk, _SUBLANE, _LANE), jnp.float32)),
        grid_spec=pltpu.PrefetchScalarGridSpec(
            num_scalar_prefetch=0,
            grid=(bk, grid_k),
            in_specs=[
                pl.BlockSpec((1, tile_rows, _LANE), lambda i, k: (i, k, 0)),
                pl.BlockSpec((1, tile_rows, _LANE), lambda i, k: (i, k, 0)),
            ],
            out_specs=[
                pl.BlockSpec((1, _SUBLANE, _LANE), lambda i, k: (i, 0, 0)),
                pl.BlockSpec((1, _SUBLANE, _LANE), lambda i, k: (i, 0, 0)),
            ],
        ),
        compiler_params=pltpu.CompilerParams(
            dimension_semantics=("parallel", "arbitrary"),
            vmem_limit_bytes=48 << 20,   # < 64 MiB physical on v7x; safe on v5e/v6e
        ),
    )(p_main, t_main)

    # Tiny JAX epilogue: cross-lane reduce of the (8,128) partials (recombining
    # virtual-batch splits), plus the <128-element tail for unaligned inputs.
    inter_b = inter.reshape(b, -1).sum(axis=1)
    denom_b = denom.reshape(b, -1).sum(axis=1)
    if tail != 0:
        p_t = p2[:, rows * _LANE:].astype(jnp.float32)
        t_t = t2[:, rows * _LANE:].astype(jnp.float32)
        inter_b = inter_b + (p_t * t_t).sum(axis=1)
        denom_b = denom_b + (p_t + t_t).sum(axis=1)

    coff = 2.0 * inter_b / denom_b        # no smoothing term: matches PyTorch ref
    return 1.0 - jnp.mean(coff)


if __name__ == "__main__":
    key = jax.random.PRNGKey(0)
    k1, k2, k3, k4, k5, k6 = jax.random.split(key, 6)

    # 1) Lane-aligned shape (batch=2, channels=4, 16x16 -> n=1024), forced
    #    through the Pallas kernel.
    pred = jax.nn.sigmoid(jax.random.normal(k1, (2, 4, 16, 16), jnp.float32))
    true = (jax.random.uniform(k2, (2, 4, 16, 16)) > 0.5).astype(jnp.float32)
    out = jax.block_until_ready(dice_loss(pred, true, min_kernel_elems=0))
    ref = _dice_loss_ref(pred, true)
    assert jnp.allclose(out, ref, rtol=1e-5, atol=1e-5), (out, ref)

    # 2) Non-lane-aligned shape (n=1875 -> 14 full rows + 83-element tail):
    #    exercises the sliced main slab, the partial last row-block mask and
    #    the tail epilogue.
    pred2 = jax.nn.sigmoid(jax.random.normal(k3, (2, 3, 25, 25), jnp.float32))
    true2 = (jax.random.uniform(k4, (2, 3, 25, 25)) > 0.5).astype(jnp.float32)
    out2 = jax.block_until_ready(dice_loss(pred2, true2, min_kernel_elems=0))
    ref2 = _dice_loss_ref(pred2, true2)
    assert jnp.allclose(out2, ref2, rtol=1e-5, atol=1e-5), (out2, ref2)

    # 2b) Same inputs with a tiny block budget so grid_k > 1 and the final
    #     row-block is partial (multi-step accumulation + masked last block).
    out2b = jax.block_until_ready(
        dice_loss(pred2, true2, max_block_bytes=_SUBLANE * _LANE * 4,
                  min_kernel_elems=0))
    assert jnp.allclose(out2b, ref2, rtol=1e-5, atol=1e-5), (out2b, ref2)

    # 3) batch=1 exercises the free row-split path (keeps both v7x TCs busy).
    pred3 = jax.nn.sigmoid(jax.random.normal(k5, (1, 4, 32, 32), jnp.float32))
    true3 = (jax.random.uniform(k6, (1, 4, 32, 32)) > 0.5).astype(jnp.float32)
    out3 = jax.block_until_ready(dice_loss(pred3, true3, min_kernel_elems=0))
    ref3 = _dice_loss_ref(pred3, true3)
    assert jnp.allclose(out3, ref3, rtol=1e-5, atol=1e-5), (out3, ref3)

    # 4) Default call on a tiny tensor takes the small-input fast path.
    out4 = jax.block_until_ready(dice_loss(pred, true))
    assert jnp.allclose(out4, ref, rtol=1e-5, atol=1e-5), (out4, ref)

    print("KERNEL_OK")
</pallas_src>

<mosaic_0001>
module attributes {stable_mosaic.version = 11 : i64} {
  func.func @_dice_partials_kernel(%arg0: i32, %arg1: i32, %arg2: memref<1x8x128xf32, #tpu.memory_space<vmem>>, %arg3: memref<1x8x128xf32, #tpu.memory_space<vmem>>, %arg4: memref<1x8x128xf32, #tpu.memory_space<vmem>>, %arg5: memref<1x8x128xf32, #tpu.memory_space<vmem>>) attributes {dimension_semantics = [#tpu.dimension_semantics<parallel>, #tpu.dimension_semantics<arbitrary>], iteration_bounds = array<i64: 2, 1>, scalar_prefetch = 0 : i64, scratch_operands = 0 : i64, tpu.core_type = #tpu.core_type<tc>, window_params = [{transform_indices = @transform_0, window_bounds = array<i64: 1, 8, 128>}, {transform_indices = @transform_1, window_bounds = array<i64: 1, 8, 128>}, {transform_indices = @transform_2, window_bounds = array<i64: 1, 8, 128>}, {transform_indices = @transform_3, window_bounds = array<i64: 1, 8, 128>}]} {
    %c0_i32 = arith.constant 0 : i32
    %0 = arith.cmpi eq, %arg1, %c0_i32 : i32
    %1 = arith.extui %0 : i1 to i32
    %c0_i32_0 = arith.constant 0 : i32
    %2 = arith.cmpi ne, %1, %c0_i32_0 : i32
    scf.if %2 {
      %cst = arith.constant 0.000000e+00 : f32
      %21 = vector.broadcast %cst : f32 to vector<1x8x128xf32>
      %c0_18 = arith.constant 0 : index
      %c0_19 = arith.constant 0 : index
      %c0_20 = arith.constant 0 : index
      %22 = vector.load %arg4[%c0_18, %c0_19, %c0_20] : memref<1x8x128xf32, #tpu.memory_space<vmem>>, vector<1x8x128xf32>
      tpu.vector_store %arg4[%c0_18, %c0_19, %c0_20], %21 {strides = array<i32>} : memref<1x8x128xf32, #tpu.memory_space<vmem>>, vector<1x8x128xf32>,
      %cst_21 = arith.constant 0.000000e+00 : f32
      %23 = vector.broadcast %cst_21 : f32 to vector<1x8x128xf32>
      %c0_22 = arith.constant 0 : index
      %c0_23 = arith.constant 0 : index
      %c0_24 = arith.constant 0 : index
      %24 = vector.load %arg5[%c0_22, %c0_23, %c0_24] : memref<1x8x128xf32, #tpu.memory_space<vmem>>, vector<1x8x128xf32>
      tpu.vector_store %arg5[%c0_22, %c0_23, %c0_24], %23 {strides = array<i32>} : memref<1x8x128xf32, #tpu.memory_space<vmem>>, vector<1x8x128xf32>,
    } else {
    }
    %c0 = arith.constant 0 : index
    %c0_1 = arith.constant 0 : index
    %c0_2 = arith.constant 0 : index
    %3 = vector.load %arg2[%c0, %c0_1, %c0_2] : memref<1x8x128xf32, #tpu.memory_space<vmem>>, vector<1x8x128xf32>
    %4 = vector.shape_cast %3 : vector<1x8x128xf32> to vector<8x128xf32>
    %c0_3 = arith.constant 0 : index
    %c0_4 = arith.constant 0 : index
    %c0_5 = arith.constant 0 : index
    %5 = vector.load %arg3[%c0_3, %c0_4, %c0_5] : memref<1x8x128xf32, #tpu.memory_space<vmem>>, vector<1x8x128xf32>
    %6 = vector.shape_cast %5 : vector<1x8x128xf32> to vector<8x128xf32>
    %7 = arith.mulf %4, %6 : vector<8x128xf32>
    %8 = arith.addf %4, %6 : vector<8x128xf32>
    %c0_6 = arith.constant 0 : index
    %c0_7 = arith.constant 0 : index
    %c0_8 = arith.constant 0 : index
    %9 = vector.load %arg4[%c0_6, %c0_7, %c0_8] : memref<1x8x128xf32, #tpu.memory_space<vmem>>, vector<1x8x128xf32>
    %10 = vector.shape_cast %9 : vector<1x8x128xf32> to vector<8x128xf32>
    %11 = arith.addf %10, %7 : vector<8x128xf32>
    %c0_9 = arith.constant 0 : index
    %c0_10 = arith.constant 0 : index
    %c0_11 = arith.constant 0 : index
    %12 = vector.load %arg4[%c0_9, %c0_10, %c0_11] : memref<1x8x128xf32, #tpu.memory_space<vmem>>, vector<1x8x128xf32>
    %13 = vector.shape_cast %12 : vector<1x8x128xf32> to vector<8x128xf32>
    %14 = vector.shape_cast %11 : vector<8x128xf32> to vector<1x8x128xf32>
    tpu.vector_store %arg4[%c0_9, %c0_10, %c0_11], %14 {strides = array<i32>} : memref<1x8x128xf32, #tpu.memory_space<vmem>>, vector<1x8x128xf32>,
    %c0_12 = arith.constant 0 : index
    %c0_13 = arith.constant 0 : index
    %c0_14 = arith.constant 0 : index
    %15 = vector.load %arg5[%c0_12, %c0_13, %c0_14] : memref<1x8x128xf32, #tpu.memory_space<vmem>>, vector<1x8x128xf32>
    %16 = vector.shape_cast %15 : vector<1x8x128xf32> to vector<8x128xf32>
    %17 = arith.addf %16, %8 : vector<8x128xf32>
    %c0_15 = arith.constant 0 : index
    %c0_16 = arith.constant 0 : index
    %c0_17 = arith.constant 0 : index
    %18 = vector.load %arg5[%c0_15, %c0_16, %c0_17] : memref<1x8x128xf32, #tpu.memory_space<vmem>>, vector<1x8x128xf32>
    %19 = vector.shape_cast %18 : vector<1x8x128xf32> to vector<8x128xf32>
    %20 = vector.shape_cast %17 : vector<8x128xf32> to vector<1x8x128xf32>
    tpu.vector_store %arg5[%c0_15, %c0_16, %c0_17], %20 {strides = array<i32>} : memref<1x8x128xf32, #tpu.memory_space<vmem>>, vector<1x8x128xf32>,
    return
  }
  func.func @transform_0(%arg0: i32, %arg1: i32) -> (i32, i32, i32) {
    %c0_i32 = arith.constant 0 : i32
    %c0_i32_0 = arith.constant 0 : i32
    return %arg0, %arg1, %c0_i32 : i32, i32, i32
  }
  func.func @transform_1(%arg0: i32, %arg1: i32) -> (i32, i32, i32) {
    %c0_i32 = arith.constant 0 : i32
    %c0_i32_0 = arith.constant 0 : i32
    return %arg0, %arg1, %c0_i32 : i32, i32, i32
  }
  func.func @transform_2(%arg0: i32, %arg1: i32) -> (i32, i32, i32) {
    %c0_i32 = arith.constant 0 : i32
    %c0_i32_0 = arith.constant 0 : i32
    %c0_i32_1 = arith.constant 0 : i32
    return %arg0, %c0_i32, %c0_i32_0 : i32, i32, i32
  }
  func.func @transform_3(%arg0: i32, %arg1: i32) -> (i32, i32, i32) {
    %c0_i32 = arith.constant 0 : i32
    %c0_i32_0 = arith.constant 0 : i32
    %c0_i32_1 = arith.constant 0 : i32
    return %arg0, %c0_i32, %c0_i32_0 : i32, i32, i32
  }
}

</mosaic_0001>

<llo_original>
// kernel: tpu_custom_call.1
$region0: #{tpu_custom_call.1}
  #allocation0 [shape = 'u32[]', space=smem, size = 0x4, offset = 0x4, fixed_abs, tag = 'smem constant byte address 0x4 - core index']
  #allocation1 [shape = 'u32[144,128]{1,0:T(1,128)}', space=vmem, size = 0x12000, scoped, tag = 'internal scratch']
  %s0 = inlined_call_operand.hbm [shape: f32[2,8,128], index: 0, kind: input, shape index: {}]
  %s1 = inlined_call_operand.hbm [shape: f32[2,8,128], index: 1, kind: input, shape index: {}]
  %s2 = inlined_call_operand.hbm [shape: f32[2,8,128], index: 2, kind: output, shape index: {0}]
  %s3 = inlined_call_operand.hbm [shape: f32[2,8,128], index: 3, kind: output, shape index: {1}]
  %4 = xla_tuple %s2, %s3
  %s5 = sld [smem:[#allocation0]]
  $region61: #{tpu_custom_call.1} parent=0
    _
  %s7 = ssub.s32 1, %s5
  %s8 = scalar_select 0, %s7, %s5
  $region1: #{tpu_custom_call.1} parent=0
    #allocation2 [shape = 'u8[8192]{0}', space=vmem, size = 0x2000, scoped, tag = 'input window, operand 0']
    #allocation3 [shape = 's32[2]{0}', space=sflag, size = 0x8, scoped, tag = 'scoped memory for tpu_custom_call.1']
    #allocation4 [shape = 's32[2]{0}', space=sflag, size = 0x8, scoped, tag = 'scoped memory for tpu_custom_call.1']
    #allocation5 [shape = 'u8[8192]{0}', space=vmem, size = 0x2000, scoped, tag = 'input window, operand 1']
    #allocation6 [shape = 's32[2]{0}', space=sflag, size = 0x8, scoped, tag = 'scoped memory for tpu_custom_call.1']
    #allocation7 [shape = 'u8[8192]{0}', space=vmem, size = 0x2000, scoped, tag = 'output window, operand 0']
    #allocation8 [shape = 'u8[8192]{0}', space=vmem, size = 0x2000, scoped, tag = 'output window, operand 1']
    #allocation9 [shape = 's32[2]{0}', space=sflag, size = 0x8, scoped, tag = 'scoped memory for tpu_custom_call.1']
    %9 = vsyncpa [#allocation3], 0
    %s10 = scalar_lea.sflag [#allocation3], 1
    %11 = vsyncpa %s10, 0
    %12 = vsyncpa [#allocation6], 0
    %s13 = scalar_lea.sflag [#allocation6], 1
    %14 = vsyncpa %s13, 0
    %15 = vsyncpa [#allocation4], 0
    %s16 = scalar_lea.sflag [#allocation4], 1
    %17 = vsyncpa %s16, 0
    %18 = vsyncpa [#allocation9], 0
    %s19 = scalar_lea.sflag [#allocation9], 1
    %20 = vsyncpa %s19, 0
    loop: start=0, step=1, limit=4
    $region2: #{tpu_custom_call.1} parent=1 // loop_pre_header
      _
    $region3: #{tpu_custom_call.1} parent=1 // loop_header
      %s22 = sphi 0, %s26
      %p23 = scmp.ge.s32.totalorder %s22, 4
      %s29 = sphi 0, %s41
      %s30 = sphi 0, %s37
      %s31 = sphi 0, %s29
      %s32 = sphi 0, %s30
      %s33 = sphi 0, %s31
      %s34 = sphi 0, %s32
      %s46 = sphi 0, %s48
      %s49 = sphi 0, %s46
      %s50 = sphi 0, %s49
      %s66 = sphi 0, %s50
      %s74 = sphi 0, %s76
      %s77 = sphi 0, %s74
      %s78 = sphi 0, %s77
      %s94 = sphi 0, %s78
      %s100 = sphi 0, %s102
      %s103 = sphi 0, %s100
      %s104 = sphi 0, %s103
      %s120 = sphi 0, %s104
      %s126 = sphi 0, %s128
      %s129 = sphi 0, %s126
      %s130 = sphi 0, %s129
      %s146 = sphi 0, %s130
    $region4: #{tpu_custom_call.1} parent=1 // loop_header_branch
      %25 = sbr.rel (%p23) target = $region8
    $region5: #{tpu_custom_call.1} parent=1 // loop_body
      %s27 = ssub.s32 %s22, 1
      %s28 = ssub.s32 %s22, 2
      %s35 = sadd.s32 1, %s30
      %p36 = scmp.ge.s32.totalorder %s35, 1
      %s37 = scalar_select %p36, 0, %s35
      %s38 = sadd.s32 1, %s29
      %s39 = scalar_select %p36, %s38, %s29
      %p40 = scmp.ge.s32.totalorder %s39, 2
      %s41 = scalar_select %p40, 0, %s39
      %s42 = ssub.s32 %s29, %s41
      %s43 = ssub.s32 %s30, %s37
      %s44 = sor.u32 %s42, %s43
      %p45 = scmp.eq.s32.totalorder %s44, 0
      %s47 = sadd.s32 %s46, 1
      %s48 = scalar_select %p45, %s46, %s47
      %p51 = pneg %p45
      %p52 = scmp.eq.s32.totalorder %s22, 1
      %p53 = por %p51, %p52
      %p54 = scmp.ne.s32.totalorder %s46, %s49
      %p55 = scmp.eq.s32.totalorder %s22, 0
      %p56 = por %p54, %p55
      %p57 = scmp.ne.s32.totalorder %s46, %s49
      %p58 = scmp.eq.s32.totalorder %s27, 1
      %p59 = por %p57, %p58
      %p60 = scmp.ne.s32.totalorder %s49, %s50
      %p61 = scmp.eq.s32.totalorder %s27, 0
      %p62 = por %p60, %p61
      %p63 = scmp.ne.s32.totalorder %s49, %s50
      %p64 = scmp.eq.s32.totalorder %s28, 1
      %p65 = por %p63, %p64
      %p67 = scmp.ne.s32.totalorder %s50, %s66
      %p68 = scmp.eq.s32.totalorder %s28, 0
      %p69 = por %p67, %p68
      %s70 = ssub.s32 %s29, %s41
      %s71 = ssub.s32 %s30, %s37
      %s72 = sor.u32 %s70, %s71
      %p73 = scmp.eq.s32.totalorder %s72, 0
      %s75 = sadd.s32 %s74, 1
      %s76 = scalar_select %p73, %s74, %s75
      %p79 = pneg %p73
      %p80 = scmp.eq.s32.totalorder %s22, 1
      %p81 = por %p79, %p80
      %p82 = scmp.ne.s32.totalorder %s74, %s77
      %p83 = scmp.eq.s32.totalorder %s22, 0
      %p84 = por %p82, %p83
      %p85 = scmp.ne.s32.totalorder %s74, %s77
      %p86 = scmp.eq.s32.totalorder %s27, 1
      %p87 = por %p85, %p86
      %p88 = scmp.ne.s32.totalorder %s77, %s78
      %p89 = scmp.eq.s32.totalorder %s27, 0
      %p90 = por %p88, %p89
      %p91 = scmp.ne.s32.totalorder %s77, %s78
      %p92 = scmp.eq.s32.totalorder %s28, 1
      %p93 = por %p91, %p92
      %p95 = scmp.ne.s32.totalorder %s78, %s94
      %p96 = scmp.eq.s32.totalorder %s28, 0
      %p97 = por %p95, %p96
      %s98 = ssub.s32 %s29, %s41
      %p99 = scmp.eq.s32.totalorder %s98, 0
      %s101 = sadd.s32 %s100, 1
      %s102 = scalar_select %p99, %s100, %s101
      %p105 = pneg %p99
      %p106 = scmp.eq.s32.totalorder %s22, 1
      %p107 = por %p105, %p106
      %p108 = scmp.ne.s32.totalorder %s100, %s103
      %p109 = scmp.eq.s32.totalorder %s22, 0
      %p110 = por %p108, %p109
      %p111 = scmp.ne.s32.totalorder %s100, %s103
      %p112 = scmp.eq.s32.totalorder %s27, 1
      %p113 = por %p111, %p112
      %p114 = scmp.ne.s32.totalorder %s103, %s104
      %p115 = scmp.eq.s32.totalorder %s27, 0
      %p116 = por %p114, %p115
      %p117 = scmp.ne.s32.totalorder %s103, %s104
      %p118 = scmp.eq.s32.totalorder %s28, 1
      %p119 = por %p117, %p118
      %p121 = scmp.ne.s32.totalorder %s104, %s120
      %p122 = scmp.eq.s32.totalorder %s28, 0
      %p123 = por %p121, %p122
      %s124 = ssub.s32 %s29, %s41
      %p125 = scmp.eq.s32.totalorder %s124, 0
      %s127 = sadd.s32 %s126, 1
      %s128 = scalar_select %p125, %s126, %s127
      %p131 = pneg %p125
      %p132 = scmp.eq.s32.totalorder %s22, 1
      %p133 = por %p131, %p132
      %p134 = scmp.ne.s32.totalorder %s126, %s129
      %p135 = scmp.eq.s32.totalorder %s22, 0
      %p136 = por %p134, %p135
      %p137 = scmp.ne.s32.totalorder %s126, %s129
      %p138 = scmp.eq.s32.totalorder %s27, 1
      %p139 = por %p137, %p138
      %p140 = scmp.ne.s32.totalorder %s129, %s130
      %p141 = scmp.eq.s32.totalorder %s27, 0
      %p142 = por %p140, %p141
      %p143 = scmp.ne.s32.totalorder %s129, %s130
      %p144 = scmp.eq.s32.totalorder %s28, 1
      %p145 = por %p143, %p144
      %p147 = scmp.ne.s32.totalorder %s130, %s146
      %p148 = scmp.eq.s32.totalorder %s28, 0
      %p149 = por %p147, %p148
      %p150 = scmp.le.s32.totalorder 1, %s22
      %p151 = scmp.lt.s32.totalorder %s22, 3
      %p152 = pnand %p150, %p151
      %p153 = pneg %p152
      // Predicated region
      $region9: #{tpu_custom_call.1} parent=5 // pred_check
        _
      $region10: #{tpu_custom_call.1} parent=5 // pred_check_branch
        %155 = sbr.rel (%p152) target = $region12
      $region11: #{tpu_custom_call.1} parent=5 // pred_region
        %s156 = ssub.s32 %s22, 1
      $region12: #{tpu_custom_call.1} parent=5 // pred_fallthru
        _
      %p157 = scmp.lt.s32.totalorder %s22, 2
      // Predicated region
      $region13: #{tpu_custom_call.1} parent=5 // pred_check
        %p158 = pneg %p157
      $region14: #{tpu_custom_call.1} parent=5 // pred_check_branch
        %160 = sbr.rel (%p158) target = $region16
      $region15: #{tpu_custom_call.1} parent=5 // pred_region
        // Predicated region
        $region17: #{tpu_custom_call.1} parent=15 // pred_check
          %p161 = pneg %p56
        $region18: #{tpu_custom_call.1} parent=15 // pred_check_branch
          %163 = sbr.rel (%p161) target = $region20
        $region19: #{tpu_custom_call.1} parent=15 // pred_region
          %s164 = sand.u32 %s46, 1
          %s165 = scalar_lea.sflag [#allocation3], %s164
          %s166 = sand.u32 %s46, 1
          %s167 = smul.addr %s166, 8
          %s168 = scalar_lea.vmem [#allocation2], %s167
          %s170 = ssub.s32 128, 128
          %171 = vsyncadd %s165, %s170
          %s172 = sadd.s32 %s30, %s29
          %s173 = smul.addr %s172, 128
          %s174 = scalar_lea.hbm %s0, %s173
          %s176 = sshll.u32 %s168, 4
          %s177 = int_to_ptr.vmem [resolvable:$true] %s176
          %179 = dma.hbm_to_vmem [thread:$0]  %s174, 128, %s177, %s165
        $region20: #{tpu_custom_call.1} parent=15 // pred_fallthru
          _
        // Predicated region
        $region21: #{tpu_custom_call.1} parent=15 // pred_check
          %p180 = pneg %p84
        $region22: #{tpu_custom_call.1} parent=15 // pred_check_branch
          %182 = sbr.rel (%p180) target = $region24
        $region23: #{tpu_custom_call.1} parent=15 // pred_region
          %s183 = sand.u32 %s74, 1
          %s184 = scalar_lea.sflag [#allocation6], %s183
          %s185 = sand.u32 %s74, 1
          %s186 = smul.addr %s185, 8
          %s187 = scalar_lea.vmem [#allocation5], %s186
          %s189 = ssub.s32 128, 128
          %190 = vsyncadd %s184, %s189
          %s191 = sadd.s32 %s30, %s29
          %s192 = smul.addr %s191, 128
          %s193 = scalar_lea.hbm %s1, %s192
          %s195 = sshll.u32 %s187, 4
          %s196 = int_to_ptr.vmem [resolvable:$true] %s195
          %198 = dma.hbm_to_vmem [thread:$0]  %s193, 128, %s196, %s184
        $region24: #{tpu_custom_call.1} parent=15 // pred_fallthru
          _
      $region16: #{tpu_custom_call.1} parent=5 // pred_fallthru
        _
      %p199 = scmp.le.s32.totalorder 1, %s22
      %p200 = scmp.lt.s32.totalorder %s22, 3
      %p201 = pnand %p199, %p200
      %p202 = pneg %p201
      // Predicated region
      $region25: #{tpu_custom_call.1} parent=5 // pred_check
        _
      $region26: #{tpu_custom_call.1} parent=5 // pred_check_branch
        %204 = sbr.rel (%p201) target = $region28
      $region27: #{tpu_custom_call.1} parent=5 // pred_region
        %s205 = ssub.s32 %s22, 1
        %s206 = sand.u32 %s49, 1
        %s207 = scalar_lea.sflag [#allocation3], %s206
        %s208 = sand.u32 %s49, 1
        %s209 = smul.addr %s208, 8
        %s210 = scalar_lea.vmem [#allocation2], %s209
        // Predicated region
        $region29: #{tpu_custom_call.1} parent=27 // pred_check
          %p211 = pneg %p62
        $region30: #{tpu_custom_call.1} parent=27 // pred_check_branch
          %213 = sbr.rel (%p211) target = $region32
        $region31: #{tpu_custom_call.1} parent=27 // pred_region
          %214 = dma.done %s207, 128
        $region32: #{tpu_custom_call.1} parent=27 // pred_fallthru
          _
        %s215 = sand.u32 %s77, 1
        %s216 = scalar_lea.sflag [#allocation6], %s215
        %s217 = sand.u32 %s77, 1
        %s218 = smul.addr %s217, 8
        %s219 = scalar_lea.vmem [#allocation5], %s218
        // Predicated region
        $region33: #{tpu_custom_call.1} parent=27 // pred_check
          %p220 = pneg %p90
        $region34: #{tpu_custom_call.1} parent=27 // pred_check_branch
          %222 = sbr.rel (%p220) target = $region36
        $region35: #{tpu_custom_call.1} parent=27 // pred_region
          %223 = dma.done %s216, 128
        $region36: #{tpu_custom_call.1} parent=27 // pred_fallthru
          _
        %s224 = sand.u32 %s49, 1
        %s225 = scalar_lea.sflag [#allocation3], %s224
        %s226 = sand.u32 %s49, 1
        %s227 = smul.addr %s226, 8
        %s228 = scalar_lea.vmem [#allocation2], %s227
        %p229 = pneg %p62
        %p230 = pneg %p59
        %s231 = sand.u32 %s77, 1
        %s232 = scalar_lea.sflag [#allocation6], %s231
        %s233 = sand.u32 %s77, 1
        %s234 = smul.addr %s233, 8
        %s235 = scalar_lea.vmem [#allocation5], %s234
        %p236 = pneg %p90
        %p237 = pneg %p87
        %p238 = pneg %p116
        %p239 = pneg %p113
        %s240 = sand.u32 %s103, 1
        %s241 = scalar_lea.sflag [#allocation4], %s240
        %s242 = sand.u32 %s103, 1
        %s243 = smul.addr %s242, 8
        %s244 = scalar_lea.vmem [#allocation7], %s243
        %p245 = pneg %p142
        %p246 = pneg %p139
        %s247 = sand.u32 %s129, 1
        %s248 = scalar_lea.sflag [#allocation9], %s247
        %s249 = sand.u32 %s129, 1
        %s250 = smul.addr %s249, 8
        %s251 = scalar_lea.vmem [#allocation8], %s250
        %p252 = scmp.eq.s32.totalorder %s32, 0
        // Predicated region
        $region37: #{tpu_custom_call.1} parent=27 // pred_check
          %p253 = pneg %p252
        $region38: #{tpu_custom_call.1} parent=27 // pred_check_branch
          %255 = sbr.rel (%p253) target = $region40
        $region39: #{tpu_custom_call.1} parent=27 // pred_region
          %256 = vst [vmem:[%s244] sm:$0xff] 0.0
          %257 = vst [vmem:[%s251] sm:$0xff] 0.0
        $region40: #{tpu_custom_call.1} parent=27 // pred_fallthru
          _
        %v258 = vld [vmem:[%s210] sm:$0xff]
        %v259 = vld [vmem:[%s219] sm:$0xff]
        %v260 = vmul.f32 %v258, %v259
        %v261 = vadd.f32 %v258, %v259
        %v262 = vld [vmem:[%s244] sm:$0xff]
        %v263 = vadd.f32 %v262, %v260
        %264 = vst [vmem:[%s244] sm:$0xff] %v263
        %v265 = vld [vmem:[%s251] sm:$0xff]
        %v266 = vadd.f32 %v265, %v261
        %267 = vst [vmem:[%s251] sm:$0xff] %v266
        %s268 = sand.u32 %s103, 1
        %s269 = scalar_lea.sflag [#allocation4], %s268
        %s270 = sand.u32 %s103, 1
        %s271 = smul.addr %s270, 8
        %s272 = scalar_lea.vmem [#allocation7], %s271
        %s273 = sand.u32 %s129, 1
        %s274 = scalar_lea.sflag [#allocation9], %s273
        %s275 = sand.u32 %s129, 1
        %s276 = smul.addr %s275, 8
        %s277 = scalar_lea.vmem [#allocation8], %s276
        // Predicated region
        $region41: #{tpu_custom_call.1} parent=27 // pred_check
          %p278 = pneg %p113
        $region42: #{tpu_custom_call.1} parent=27 // pred_check_branch
          %280 = sbr.rel (%p278) target = $region44
        $region43: #{tpu_custom_call.1} parent=27 // pred_region
          %s282 = ssub.s32 128, 128
          %283 = vsyncadd %s269, %s282
          %s284 = smul.addr %s31, 128
          %s285 = scalar_lea.hbm %s2, %s284
          %s287 = sshll.u32 %s272, 4
          %s288 = int_to_ptr.vmem [resolvable:$true] %s287
          %290 = dma.vmem_to_hbm [thread:$0]  %s288, 128, %s285, %s269
        $region44: #{tpu_custom_call.1} parent=27 // pred_fallthru
          _
        // Predicated region
        $region45: #{tpu_custom_call.1} parent=27 // pred_check
          %p291 = pneg %p139
        $region46: #{tpu_custom_call.1} parent=27 // pred_check_branch
          %293 = sbr.rel (%p291) target = $region48
        $region47: #{tpu_custom_call.1} parent=27 // pred_region
          %s295 = ssub.s32 128, 128
          %296 = vsyncadd %s274, %s295
          %s297 = smul.addr %s31, 128
          %s298 = scalar_lea.hbm %s3, %s297
          %s300 = sshll.u32 %s277, 4
          %s301 = int_to_ptr.vmem [resolvable:$true] %s300
          %303 = dma.vmem_to_hbm [thread:$0]  %s301, 128, %s298, %s274
        $region48: #{tpu_custom_call.1} parent=27 // pred_fallthru
          _
      $region28: #{tpu_custom_call.1} parent=5 // pred_fallthru
        _
      %p304 = scmp.le.s32.totalorder 2, %s22
      // Predicated region
      $region49: #{tpu_custom_call.1} parent=5 // pred_check
        %p305 = pneg %p304
      $region50: #{tpu_custom_call.1} parent=5 // pred_check_branch
        %307 = sbr.rel (%p305) target = $region52
      $region51: #{tpu_custom_call.1} parent=5 // pred_region
        %s308 = ssub.s32 %s22, 2
        // Predicated region
        $region53: #{tpu_custom_call.1} parent=51 // pred_check
          %p309 = pneg %p119
        $region54: #{tpu_custom_call.1} parent=51 // pred_check_branch
          %311 = sbr.rel (%p309) target = $region56
        $region55: #{tpu_custom_call.1} parent=51 // pred_region
          %s312 = sand.u32 %s104, 1
          %s313 = scalar_lea.sflag [#allocation4], %s312
          %s314 = sand.u32 %s104, 1
          %s315 = smul.addr %s314, 8
          %s316 = scalar_lea.vmem [#allocation7], %s315
          %317 = dma.done %s313, 128
        $region56: #{tpu_custom_call.1} parent=51 // pred_fallthru
          _
        // Predicated region
        $region57: #{tpu_custom_call.1} parent=51 // pred_check
          %p318 = pneg %p145
        $region58: #{tpu_custom_call.1} parent=51 // pred_check_branch
          %320 = sbr.rel (%p318) target = $region60
        $region59: #{tpu_custom_call.1} parent=51 // pred_region
          %s321 = sand.u32 %s130, 1
          %s322 = scalar_lea.sflag [#allocation9], %s321
          %s323 = sand.u32 %s130, 1
          %s324 = smul.addr %s323, 8
          %s325 = scalar_lea.vmem [#allocation8], %s324
          %326 = dma.done %s322, 128
        $region60: #{tpu_custom_call.1} parent=51 // pred_fallthru
          _
      $region52: #{tpu_custom_call.1} parent=5 // pred_fallthru
        _
    $region6: #{tpu_custom_call.1} parent=1 // loop_footer
      %s26 = sadd.s32 1, %s22
    $region7: #{tpu_custom_call.1} parent=1 // loop_footer_branch
      %21 = sbr.rel target = $region3
    $region8: #{tpu_custom_call.1} parent=1 // loop_exit
      _
    %327 = vsyncpa [#allocation3], 1
    %s328 = scalar_lea.sflag [#allocation3], 1
    %329 = vsyncpa %s328, 1
    %330 = vsyncpa [#allocation6], 1
    %s331 = scalar_lea.sflag [#allocation6], 1
    %332 = vsyncpa %s331, 1
    %333 = vsyncpa [#allocation4], 1
    %s334 = scalar_lea.sflag [#allocation4], 1
    %335 = vsyncpa %s334, 1
    %336 = vsyncpa [#allocation9], 1
    %s337 = scalar_lea.sflag [#allocation9], 1
    %338 = vsyncpa %s337, 1

</llo_original>
